<compile_context>
chip_gen: v7x
topology: tpu7x:2x2x1
jax: 0.10.0
libtpu: 0.0.40
codegen_flags: <defaults>
</compile_context>

<pallas_src>
from functools import partial

import jax
import jax.numpy as jnp
from jax.experimental import pallas as pl
from jax.experimental.pallas import tpu as pltpu


def _round_up(a, b):
    return (a + b - 1) // b * b


def _cdiv(a, b):
    return (a + b - 1) // b


def _vmem_capacity_bytes():
    """Per-core VMEM capacity; conservative fallback if the query fails."""
    try:
        info = pltpu.get_tpu_info()
        cap = int(getattr(info, "vmem_capacity_bytes", 0) or 0)
        if cap > 0:
            return cap
    except Exception:
        pass
    return 64 * 1024 * 1024          # v7x per-TC VMEM (most conservative)


# ---------------------------------------------------------------------------
# Fused Pallas kernel: grid = (cores, N-steps-per-core); N is the reduction.
# ---------------------------------------------------------------------------
def _cdrkm_kernel(x_ref, h_ref, g_ref, o_ref, *,
                  s0, tile_n, n_total, steps_per_core, needs_mask):
    """
    x_ref : (tile_n, d)  N-slab of the level-0 input (N on sublanes).
    h_ref : (S, tile_n)  N-slab of the stored hidden parameter (N on lanes).
    g_ref : (s0, d) f32  per-core accumulator of H0 @ X  (resident over steps).
    o_ref : (S, S)  f32  per-core accumulator of H @ H^T (resident over steps).
    """
    c = pl.program_id(0)
    k = pl.program_id(1)

    @pl.when(k == 0)
    def _init():
        g_ref[...] = jnp.zeros_like(g_ref)
        o_ref[...] = jnp.zeros_like(o_ref)

    h = h_ref[...]                       # (S, tile_n), stored dtype
    x = x_ref[...]                       # (tile_n, d), caller dtype

    if needs_mask:
        # Ragged / clamped tiles: zero the N positions past the true N so the
        # garbage in a partially-OOB VMEM block contributes nothing.
        offset = (c * steps_per_core + k) * tile_n
        col = jax.lax.broadcasted_iota(jnp.int32, h.shape, 1)
        h = jnp.where(col + offset < n_total, h, jnp.zeros_like(h))
        row = jax.lax.broadcasted_iota(jnp.int32, x.shape, 0)
        x = jnp.where(row + offset < n_total, x, jnp.zeros_like(x))

    if x.dtype != h.dtype:
        x = x.astype(h.dtype)            # in-register cast: no extra HBM pass

    h0 = h[0:s0, :]                      # static prefix row slice -> (s0, tile_n)

    # G += H0 @ X  (contract over N; lhs-last vs rhs-first, MXU canonical).
    g_ref[...] += jax.lax.dot_general(
        h0, x, (((1,), (0,)), ((), ())), preferred_element_type=jnp.float32)
    # O += H @ H^T (contract over N).
    o_ref[...] += jax.lax.dot_general(
        h, h, (((1,), (1,)), ((), ())), preferred_element_type=jnp.float32)


# ---------------------------------------------------------------------------
# CDRKM wrapper (parameter setup + one fused pallas_call + tiny JAX epilogue)
# ---------------------------------------------------------------------------
class CDRKM:
    def __init__(self, s, N, gamma=1.0, key=None,
                 compute_dtype=jnp.float32, tile_n=None):
        # layerwisein=False, ortoin=False path of the torch module:
        # each level's h is an independent random-normal (N, s_i) matrix.
        assert len(s) >= 1
        self.s = [int(v) for v in s]
        self.N = int(N)
        self.gamma = float(gamma)
        self.eta = self.gamma
        self.n_levels = len(self.s)
        self.compute_dtype = compute_dtype
        self.tile_n = tile_n
        key = jax.random.PRNGKey(0) if key is None else key
        keys = jax.random.split(key, self.n_levels)
        hs = [jax.random.normal(k, (self.N, si), dtype=jnp.float32)
              for k, si in zip(keys, self.s)]
        # registered parameter: torch.cat([level.h], dim=1).t() -> (sum(s), N).
        # Cast ONCE here (it is a parameter) -> no per-call astype HBM pass.
        self.h = jnp.concatenate(hs, axis=1).T.astype(compute_dtype)
        self._forward = None
        self._key = None

    # --------------------------------------------------------------
    def _build_forward(self, d, x_dtype):
        s = tuple(self.s)
        S = sum(s)
        N = self.N
        n_levels = self.n_levels
        eta = self.eta
        offs = [sum(s[:i]) for i in range(n_levels)]

        isz_h = jnp.dtype(self.h.dtype).itemsize
        isz_x = jnp.dtype(x_dtype).itemsize
        sub_h = 8 * max(1, 4 // isz_h)            # sublane packing (bf16 -> 16)

        # ---- honest VMEM accounting (lane/sublane padding + f32 accumulators)
        x_bytes_per_n = _round_up(d, 128) * isz_x           # (tn, d) tile, per n-row
        h_bytes_per_n = _round_up(S, sub_h) * isz_h         # (S, tn) tile, per n-col
        o_bytes = _round_up(S, 8) * _round_up(S, 128) * 4
        g_bytes = _round_up(s[0], 8) * _round_up(d, 128) * 4
        fixed = 2 * (o_bytes + g_bytes)                     # (possibly) 2-buffered outs
        reserve = 4 * 1024 * 1024                           # compiler internal scratch

        vmem_cap = _vmem_capacity_bytes()
        vmem_limit = (3 * vmem_cap) // 4          # ~96 MiB v5e/v6e, ~48 MiB v7x
        # TODO(synk): S-tile the (S, S) accumulator once it no longer fits VMEM.
        assert fixed + reserve < vmem_limit, (
            f"(S,S)={S}x{S} f32 accumulator does not fit the VMEM budget "
            f"({vmem_limit} B); S-tiling would be required.")

        # ---- N-tile selection: biggest tile the budget allows (multiple of 128)
        if self.tile_n is not None:
            tn = int(self.tile_n)
            assert tn >= N or tn % 128 == 0, "tile_n must be a multiple of 128 (or >= N)"
        else:
            budget = vmem_limit - fixed - reserve
            # x2 double-buffering + ~1.5x for in-kernel masked/cast temporaries.
            per_n = max(1, int((x_bytes_per_n + h_bytes_per_n) * 3.5))
            tn = max(128, (budget // per_n) // 128 * 128)
        if tn >= N:
            tn = N                                 # single full tile, exact blocks
        steps_total = _cdiv(N, tn)
        num_cores = 2 if steps_total >= 2 else 1   # v7x megacore split; harmless on 1 TC
        spc = _cdiv(steps_total, num_cores)        # steps per core
        needs_mask = (num_cores * spc * tn) != N
        last_blk = steps_total - 1

        def _blk(c, k):
            # Clamp so no tile DMA starts fully out of bounds; the in-kernel
            # mask (unclamped offset >= N) zeroes the clamped tile's contribution.
            return jnp.minimum(c * spc + k, last_blk)

        kernel = partial(_cdrkm_kernel, s0=s[0], tile_n=tn, n_total=N,
                         steps_per_core=spc, needs_mask=needs_mask)

        pc = pl.pallas_call(
            kernel,
            out_shape=(
                jax.ShapeDtypeStruct((num_cores, s[0], d), jnp.float32),  # G partials
                jax.ShapeDtypeStruct((num_cores, S, S), jnp.float32),     # O partials
            ),
            grid_spec=pltpu.PrefetchScalarGridSpec(
                num_scalar_prefetch=0,
                grid=(num_cores, spc),
                in_specs=[
                    pl.BlockSpec((tn, d), lambda c, k: (_blk(c, k), 0)),   # x slab
                    pl.BlockSpec((S, tn), lambda c, k: (0, _blk(c, k))),   # h slab
                ],
                out_specs=[
                    pl.BlockSpec((None, s[0], d), lambda c, k: (c, 0, 0)),
                    pl.BlockSpec((None, S, S), lambda c, k: (c, 0, 0)),
                ],
            ),
            compiler_params=pltpu.CompilerParams(
                dimension_semantics=("parallel", "arbitrary"),
                vmem_limit_bytes=int(vmem_limit),
            ),
        )

        inv2eta = 1.0 / (2.0 * eta)
        s_tot = float(S)

        def forward(x_in, h_in):
            g_p, o_p = pc(x_in, h_in)
            g = jnp.sum(g_p, axis=0)               # (s0, d)
            o = jnp.sum(o_p, axis=0)               # (S, S)
            # level 0 loss: -||H0 X||_F^2 / (2 eta)
            losses = [-jnp.sum(g * g) * inv2eta]
            # level i>0 loss: -||H_i H_{i-1}^T||_F^2 / (2 eta)
            for i in range(1, n_levels):
                blk = o[offs[i]:offs[i] + s[i], offs[i - 1]:offs[i - 1] + s[i - 1]]
                losses.append(-jnp.sum(blk * blk) * inv2eta)
            losses = jnp.stack(losses)
            # orto_i = ||B - I||_F^2 = sum(B*B) - 2 tr(B) + s_i  (diag block B)
            ortos = []
            diag_traces = []
            for i in range(n_levels):
                blk = o[offs[i]:offs[i] + s[i], offs[i]:offs[i] + s[i]]
                tr = jnp.trace(blk)
                diag_traces.append(tr)
                ortos.append(jnp.sum(blk * blk) - 2.0 * tr + float(s[i]))
            ortos = jnp.stack(ortos)
            # trace(O) = sum of diagonal-block traces (blocks tile the diagonal).
            io2 = jnp.sum(o * o) - 2.0 * sum(diag_traces) + s_tot
            return jnp.sum(losses), losses, ortos, io2, jnp.sqrt(io2)

        return jax.jit(forward)

    # --------------------------------------------------------------
    def __call__(self, x):
        assert x.shape[0] == self.N
        d = int(x.shape[1])
        key = (d, jnp.dtype(x.dtype))
        if self._forward is None or self._key != key:
            self._key = key
            self._forward = self._build_forward(d, x.dtype)
        total, losses, ortos_v, interorto2, interorto = self._forward(x, self.h)
        ortos = [ortos_v[i] for i in range(self.n_levels)]
        # level views in the torch (N, s_i) convention (API glue only)
        offs = [sum(self.s[:i]) for i in range(self.n_levels)]
        h = [self.h[o:o + si, :].T for o, si in zip(offs, self.s)]
        return total, losses, ortos, interorto2, interorto, h


# ---------------------------------------------------------------------------
# Pure-JAX reference (original formulation, f32) — sanity check only
# ---------------------------------------------------------------------------
def _ref_forward(model, x):
    # Round to the model's compute dtype (matches the kernel's input rounding),
    # then compute everything in f32 the "torch way" (materializing K).
    xr = x.astype(model.compute_dtype).astype(jnp.float32)
    ht = model.h.astype(jnp.float32).T
    offs = [sum(model.s[:i]) for i in range(model.n_levels)]
    h = [ht[:, o:o + si] for o, si in zip(offs, model.s)]

    def lvl_loss(xi, hi):
        k = xi @ xi.T
        f1 = jnp.trace(k @ hi @ hi.T)
        return -f1 / (2.0 * model.eta)

    def orto_ref(hi):
        o = hi.T @ hi - jnp.eye(hi.shape[1], dtype=jnp.float32)
        return jnp.sum(o * o)

    losses = [lvl_loss(xr, h[0])]
    for i in range(1, model.n_levels):
        losses.append(lvl_loss(h[i - 1], h[i]))
    losses = jnp.stack(losses)
    ortos = [orto_ref(hi) for hi in h]
    io2 = orto_ref(ht)
    return jnp.sum(losses), losses, ortos, io2, jnp.sqrt(io2), h


def _check(out, ref, rtol, atol, tag):
    total, losses, ortos, io2, io, _ = out
    r_total, r_losses, r_ortos, r_io2, r_io, _ = ref
    assert jnp.allclose(total, r_total, rtol=rtol, atol=atol), f"{tag}: total"
    assert jnp.allclose(losses, r_losses, rtol=rtol, atol=atol), f"{tag}: losses"
    for i, (a, b) in enumerate(zip(ortos, r_ortos)):
        assert jnp.allclose(a, b, rtol=rtol, atol=atol), f"{tag}: orto[{i}]"
    assert jnp.allclose(io2, r_io2, rtol=rtol, atol=atol), f"{tag}: interorto2"
    assert jnp.allclose(io, r_io, rtol=rtol, atol=atol), f"{tag}: interorto"


if __name__ == "__main__":
    key = jax.random.PRNGKey(0)
    k_x1, k_m1, k_x2, k_m2, k_x3, k_m3 = jax.random.split(key, 6)

    # --- case 1: tiny shapes, single exact tile, f32, tight tolerance -------
    N1, d1, s1 = 8, 16, [4, 3]
    x1 = jax.random.normal(k_x1, (N1, d1), dtype=jnp.float32)
    model1 = CDRKM(s=s1, N=N1, gamma=1.0, key=k_m1, compute_dtype=jnp.float32)
    out1 = model1(x1)
    jax.block_until_ready(out1[0])
    _check(out1, _ref_forward(model1, x1), rtol=1e-4, atol=1e-4, tag="f32-small")

    # --- case 2: ragged N (mask + clamped OOB tile), 2-core grid, f32 -------
    N2, d2, s2 = 300, 32, [8, 5]
    x2 = jax.random.normal(k_x2, (N2, d2), dtype=jnp.float32)
    model2 = CDRKM(s=s2, N=N2, gamma=0.5, key=k_m2,
                   compute_dtype=jnp.float32, tile_n=128)   # grid = (2, 2)
    out2 = model2(x2)
    jax.block_until_ready(out2[0])
    _check(out2, _ref_forward(model2, x2), rtol=2e-3, atol=1e-1, tag="f32-ragged")

    # --- case 3: bf16 streaming (h stored bf16, x cast in-kernel), ragged ---
    N3, d3, s3 = 384, 16, [8, 5, 4]
    x3 = jax.random.normal(k_x3, (N3, d3), dtype=jnp.float32)
    model3 = CDRKM(s=s3, N=N3, gamma=1.0, key=k_m3,
                   compute_dtype=jnp.bfloat16, tile_n=128)  # grid = (2, 2)
    out3 = model3(x3)
    jax.block_until_ready(out3[0])
    _check(out3, _ref_forward(model3, x3), rtol=5e-2, atol=1.0, tag="bf16")

    # TODO(synk): layerwisein=True (kPCA/SVD init) and ortoin=True (orthogonal
    # init) parameter-initialization paths of the torch module are not
    # implemented; only the default random-normal init / forward pass is.
    print("KERNEL_OK")
</pallas_src>

<mosaic_0001>
module attributes {stable_mosaic.version = 11 : i64} {
  func.func @_cdrkm_kernel(%arg0: i32, %arg1: i32, %arg2: memref<8x16xf32, #tpu.memory_space<vmem>>, %arg3: memref<7x8xf32, #tpu.memory_space<vmem>>, %arg4: memref<1x4x16xf32, #tpu.memory_space<vmem>>, %arg5: memref<1x7x7xf32, #tpu.memory_space<vmem>>) attributes {dimension_semantics = [#tpu.dimension_semantics<parallel>, #tpu.dimension_semantics<arbitrary>], iteration_bounds = array<i64: 1, 1>, scalar_prefetch = 0 : i64, scratch_operands = 0 : i64, tpu.core_type = #tpu.core_type<tc>, window_params = [{transform_indices = @transform_0, window_bounds = array<i64: 8, 16>}, {transform_indices = @transform_1, window_bounds = array<i64: 7, 8>}, {transform_indices = @transform_2, window_bounds = array<i64: 1, 4, 16>}, {transform_indices = @transform_3, window_bounds = array<i64: 1, 7, 7>}]} {
    %c0_i32 = arith.constant 0 : i32
    %0 = arith.cmpi eq, %arg1, %c0_i32 : i32
    %1 = arith.extui %0 : i1 to i32
    %c0_i32_0 = arith.constant 0 : i32
    %2 = arith.cmpi ne, %1, %c0_i32_0 : i32
    scf.if %2 {
      %cst_17 = arith.constant 0.000000e+00 : f32
      %20 = vector.broadcast %cst_17 : f32 to vector<4x16xf32>
      %c0_18 = arith.constant 0 : index
      %c0_19 = arith.constant 0 : index
      %c0_20 = arith.constant 0 : index
      %21 = vector.load %arg4[%c0_18, %c0_19, %c0_20] : memref<1x4x16xf32, #tpu.memory_space<vmem>>, vector<1x4x16xf32>
      %22 = vector.shape_cast %21 : vector<1x4x16xf32> to vector<4x16xf32>
      %23 = vector.shape_cast %20 : vector<4x16xf32> to vector<1x4x16xf32>
      tpu.vector_store %arg4[%c0_18, %c0_19, %c0_20], %23 {strides = array<i32>} : memref<1x4x16xf32, #tpu.memory_space<vmem>>, vector<1x4x16xf32>,
      %cst_21 = arith.constant 0.000000e+00 : f32
      %24 = vector.broadcast %cst_21 : f32 to vector<7x7xf32>
      %c0_22 = arith.constant 0 : index
      %c0_23 = arith.constant 0 : index
      %c0_24 = arith.constant 0 : index
      %25 = vector.load %arg5[%c0_22, %c0_23, %c0_24] : memref<1x7x7xf32, #tpu.memory_space<vmem>>, vector<1x7x7xf32>
      %26 = vector.shape_cast %25 : vector<1x7x7xf32> to vector<7x7xf32>
      %27 = vector.shape_cast %24 : vector<7x7xf32> to vector<1x7x7xf32>
      tpu.vector_store %arg5[%c0_22, %c0_23, %c0_24], %27 {strides = array<i32>} : memref<1x7x7xf32, #tpu.memory_space<vmem>>, vector<1x7x7xf32>,
    } else {
    }
    %c0 = arith.constant 0 : index
    %c0_1 = arith.constant 0 : index
    %3 = vector.load %arg3[%c0, %c0_1] : memref<7x8xf32, #tpu.memory_space<vmem>>, vector<7x8xf32>
    %c0_2 = arith.constant 0 : index
    %c0_3 = arith.constant 0 : index
    %4 = vector.load %arg2[%c0_2, %c0_3] : memref<8x16xf32, #tpu.memory_space<vmem>>, vector<8x16xf32>
    %5 = vector.extract_strided_slice %3 {offsets = [0, 0], sizes = [4, 8], strides = [1, 1]} : vector<7x8xf32> to vector<4x8xf32>
    %c0_4 = arith.constant 0 : index
    %c0_5 = arith.constant 0 : index
    %c0_6 = arith.constant 0 : index
    %6 = vector.load %arg4[%c0_4, %c0_5, %c0_6] : memref<1x4x16xf32, #tpu.memory_space<vmem>>, vector<1x4x16xf32>
    %7 = vector.shape_cast %6 : vector<1x4x16xf32> to vector<4x16xf32>
    %cst = arith.constant dense<0.000000e+00> : vector<4x16xf32>
    %8 = tpu.matmul %5, %4, %cst {dimension_numbers = #tpu.dot_dimension_numbers<[1], [0], [0], [1], [0, 0, 1, 1], [], []>} : vector<4x8xf32>, vector<8x16xf32>, vector<4x16xf32> -> vector<4x16xf32>
    %9 = arith.addf %7, %8 : vector<4x16xf32>
    %c0_7 = arith.constant 0 : index
    %c0_8 = arith.constant 0 : index
    %c0_9 = arith.constant 0 : index
    %10 = vector.load %arg4[%c0_7, %c0_8, %c0_9] : memref<1x4x16xf32, #tpu.memory_space<vmem>>, vector<1x4x16xf32>
    %11 = vector.shape_cast %10 : vector<1x4x16xf32> to vector<4x16xf32>
    %12 = vector.shape_cast %9 : vector<4x16xf32> to vector<1x4x16xf32>
    tpu.vector_store %arg4[%c0_7, %c0_8, %c0_9], %12 {strides = array<i32>} : memref<1x4x16xf32, #tpu.memory_space<vmem>>, vector<1x4x16xf32>,
    %c0_10 = arith.constant 0 : index
    %c0_11 = arith.constant 0 : index
    %c0_12 = arith.constant 0 : index
    %13 = vector.load %arg5[%c0_10, %c0_11, %c0_12] : memref<1x7x7xf32, #tpu.memory_space<vmem>>, vector<1x7x7xf32>
    %14 = vector.shape_cast %13 : vector<1x7x7xf32> to vector<7x7xf32>
    %cst_13 = arith.constant dense<0.000000e+00> : vector<7x7xf32>
    %15 = tpu.matmul %3, %3, %cst_13 {dimension_numbers = #tpu.dot_dimension_numbers<[1], [1], [0], [0], [0, 0, 1, 0], [], []>} : vector<7x8xf32>, vector<7x8xf32>, vector<7x7xf32> -> vector<7x7xf32>
    %16 = arith.addf %14, %15 : vector<7x7xf32>
    %c0_14 = arith.constant 0 : index
    %c0_15 = arith.constant 0 : index
    %c0_16 = arith.constant 0 : index
    %17 = vector.load %arg5[%c0_14, %c0_15, %c0_16] : memref<1x7x7xf32, #tpu.memory_space<vmem>>, vector<1x7x7xf32>
    %18 = vector.shape_cast %17 : vector<1x7x7xf32> to vector<7x7xf32>
    %19 = vector.shape_cast %16 : vector<7x7xf32> to vector<1x7x7xf32>
    tpu.vector_store %arg5[%c0_14, %c0_15, %c0_16], %19 {strides = array<i32>} : memref<1x7x7xf32, #tpu.memory_space<vmem>>, vector<1x7x7xf32>,
    return
  }
  func.func @transform_0(%arg0: i32, %arg1: i32) -> (i32, i32) {
    %c1_i32 = arith.constant 1 : i32
    %0 = arith.muli %arg0, %c1_i32 : i32
    %1 = arith.addi %0, %arg1 : i32
    %c0_i32 = arith.constant 0 : i32
    %2 = arith.minsi %1, %c0_i32 : i32
    %c0_i32_0 = arith.constant 0 : i32
    %c0_i32_1 = arith.constant 0 : i32
    return %2, %c0_i32_0 : i32, i32
  }
  func.func @transform_1(%arg0: i32, %arg1: i32) -> (i32, i32) {
    %c1_i32 = arith.constant 1 : i32
    %0 = arith.muli %arg0, %c1_i32 : i32
    %1 = arith.addi %0, %arg1 : i32
    %c0_i32 = arith.constant 0 : i32
    %2 = arith.minsi %1, %c0_i32 : i32
    %c0_i32_0 = arith.constant 0 : i32
    %c0_i32_1 = arith.constant 0 : i32
    return %c0_i32_0, %2 : i32, i32
  }
  func.func @transform_2(%arg0: i32, %arg1: i32) -> (i32, i32, i32) {
    %c0_i32 = arith.constant 0 : i32
    %c0_i32_0 = arith.constant 0 : i32
    %c0_i32_1 = arith.constant 0 : i32
    return %arg0, %c0_i32, %c0_i32_0 : i32, i32, i32
  }
  func.func @transform_3(%arg0: i32, %arg1: i32) -> (i32, i32, i32) {
    %c0_i32 = arith.constant 0 : i32
    %c0_i32_0 = arith.constant 0 : i32
    %c0_i32_1 = arith.constant 0 : i32
    return %arg0, %c0_i32, %c0_i32_0 : i32, i32, i32
  }
}

</mosaic_0001>

<llo_original>
// kernel: forward.1
$region0: #{forward.1}
  #allocation0 [shape = 'u32[]', space=smem, size = 0x4, offset = 0x4, fixed_abs, tag = 'smem constant byte address 0x4 - core index']
  #allocation1 [shape = 'u32[144,128]{1,0:T(1,128)}', space=vmem, size = 0x12000, scoped, tag = 'internal scratch']
  %s0 = inlined_call_operand.hbm [shape: f32[8,16], index: 0, kind: input, shape index: {}]
  %s1 = inlined_call_operand.hbm [shape: f32[7,8], index: 1, kind: input, shape index: {}]
  %s2 = inlined_call_operand.vmem [shape: f32[1,4,16], index: 2, kind: output, shape index: {0}]
  %s3 = inlined_call_operand.vmem [shape: f32[1,7,7], index: 3, kind: output, shape index: {1}]
  %4 = xla_tuple %s2, %s3
  %s5 = sld [smem:[#allocation0]]
  $region38: #{forward.1} parent=0
    _
  %s7 = ssub.s32 1, %s5
  %s8 = scalar_select 0, %s7, %s5
  $region1: #{forward.1} parent=0
    #allocation2 [shape = 'u8[4096]{0}', space=vmem, size = 0x1000, scoped, tag = 'input window, operand 0, single buffered']
    #allocation3 [shape = 's32[1]{0}', space=sflag, size = 0x4, scoped, tag = 'scoped memory for forward.1']
    #allocation4 [shape = 'u8[4096]{0}', space=vmem, size = 0x1000, scoped, tag = 'input window, operand 1, single buffered']
    #allocation5 [shape = 's32[1]{0}', space=sflag, size = 0x4, scoped, tag = 'scoped memory for forward.1']
    %9 = vsyncpa [#allocation3], 0
    %10 = vsyncpa [#allocation5], 0
    // Predicated region
    $region2: #{forward.1} parent=1 // pred_check
      _
    $region3: #{forward.1} parent=1 // pred_check_branch
      %12 = sbr.rel (0) target = $region5
    $region4: #{forward.1} parent=1 // pred_region
      %s13 = sadd.s32 0, 0
      %p14 = scmp.lt.s32.totalorder %s13, 0
      %s15 = scalar_select %p14, %s13, 0
      %s17 = ssub.s32 128, 128
      %18 = vsyncadd [#allocation3], %s17
      %s19 = smul.addr %s15, 128
      %s20 = scalar_lea.hbm %s0, %s19
      %s22 = sshll.u32 [#allocation2], 4
      %s23 = int_to_ptr.vmem [resolvable:$true] %s22
      %25 = dma.hbm_to_vmem [thread:$0]  %s20, 128, %s23, [#allocation3]
    $region5: #{forward.1} parent=1 // pred_fallthru
      _
    // Predicated region
    $region6: #{forward.1} parent=1 // pred_check
      _
    $region7: #{forward.1} parent=1 // pred_check_branch
      %27 = sbr.rel (0) target = $region9
    $region8: #{forward.1} parent=1 // pred_region
      %s28 = sadd.s32 0, 0
      %p29 = scmp.lt.s32.totalorder %s28, 0
      %s30 = scalar_select %p29, %s28, 0
      %s32 = ssub.s32 128, 128
      %33 = vsyncadd [#allocation5], %s32
      %s34 = smul.addr %s30, 128
      %s35 = scalar_lea.hbm %s1, %s34
      %s37 = sshll.u32 [#allocation4], 4
      %s38 = int_to_ptr.vmem [resolvable:$true] %s37
      %40 = dma.hbm_to_vmem [thread:$0]  %s35, 128, %s38, [#allocation5]
    $region9: #{forward.1} parent=1 // pred_fallthru
      _
    // Predicated region
    $region10: #{forward.1} parent=1 // pred_check
      _
    $region11: #{forward.1} parent=1 // pred_check_branch
      %42 = sbr.rel (0) target = $region13
    $region12: #{forward.1} parent=1 // pred_region
      %43 = dma.done [#allocation3], 128
    $region13: #{forward.1} parent=1 // pred_fallthru
      _
    // Predicated region
    $region14: #{forward.1} parent=1 // pred_check
      _
    $region15: #{forward.1} parent=1 // pred_check_branch
      %45 = sbr.rel (0) target = $region17
    $region16: #{forward.1} parent=1 // pred_region
      %46 = dma.done [#allocation5], 128
    $region17: #{forward.1} parent=1 // pred_fallthru
      _
    %s47 = sadd.s32 0, 0
    %p48 = scmp.lt.s32.totalorder %s47, 0
    %s49 = scalar_select %p48, %s47, 0
    %s50 = sadd.s32 0, 0
    %p51 = scmp.lt.s32.totalorder %s50, 0
    %s52 = scalar_select %p51, %s50, 0
    %p53 = scmp.eq.s32.totalorder 0, 0
    // Predicated region
    $region18: #{forward.1} parent=1 // pred_check
      %p54 = pneg %p53
    $region19: #{forward.1} parent=1 // pred_check_branch
      %56 = sbr.rel (%p54) target = $region21
    $region20: #{forward.1} parent=1 // pred_region
      %vm57 = vcmask 125952
      %58 = vst.msk [vmem:[%s2] sm:$0xf] %vm57, 0.0
      %vm59 = vcmask 55296
      %60 = vst.msk [vmem:[%s3] sm:$0x7f] %vm59, 0.0
    $region21: #{forward.1} parent=1 // pred_fallthru
      _
    %v61 = vld [vmem:[#allocation4] sm:$0x7f]
    %v62 = vld [vmem:[#allocation2] sm:$0xff]
    %v63 = vld [vmem:[%s2] sm:$0xf]
    %vm64 = vcmask 64512
    %v66 = vsel %vm64, %v61, 0
    %68 = vmatprep.subr.mxu0 0.0
    %69 = vmatpush1.msra.mxu0 %v62
    %70 = vmatprep.subr.mxu0 0.0
    %71 = vmatpush1.msra.mxu0 0.0
    %72 = vmatprep.subr.mxu0 0.0
    %73 = vmatpush1.msra.mxu0 0.0
    %74 = vmatprep.subr.mxu0 0.0
    %75 = vmatpush1.msra.mxu0 0.0
    %76 = vmatprep.subr.mxu0 0.0
    %77 = vmatpush1.msra.mxu0 0.0
    %78 = vmatprep.subr.mxu0 0.0
    %79 = vmatpush1.msra.mxu0 0.0
    %80 = vmatprep.subr.mxu0 0.0
    %81 = vmatpush1.msra.mxu0 0.0
    %82 = vmatprep.subr.mxu0 0.0
    %83 = vmatpush1.msra.mxu0 0.0
    %84 = vmatprep.subr.mxu0 0.0
    %85 = vmatpush1.msra.mxu0 0.0
    %86 = vmatprep.subr.mxu0 0.0
    %87 = vmatpush1.msra.mxu0 0.0
    %88 = vmatprep.subr.mxu0 0.0
    %89 = vmatpush1.msra.mxu0 0.0
    %90 = vmatprep.subr.mxu0 0.0
    %91 = vmatpush1.msra.mxu0 0.0
    %92 = vmatprep.subr.mxu0 0.0
    %93 = vmatpush1.msra.mxu0 0.0
    %94 = vmatprep.subr.mxu0 0.0
    %95 = vmatpush1.msra.mxu0 0.0
    %96 = vmatprep.subr.mxu0 0.0
    %97 = vmatpush1.msra.mxu0 0.0
    %98 = vmatprep.subr.mxu0 0.0
    %99 = vmatpush1.msra.mxu0 0.0
    %100 = vmatprep.subr.mxu0 0.0
    %101 = vmatpush1.msra.mxu0 0.0
    %102 = vmatprep.subr.mxu0 0.0
    %103 = vmatpush1.msra.mxu0 0.0
    %104 = vmatprep.subr.mxu0 0.0
    %105 = vmatpush1.msra.mxu0 0.0
    %106 = vmatprep.subr.mxu0 0.0
    %107 = vmatpush1.msra.mxu0 0.0
    %108 = vmatprep.subr.mxu0 0.0
    %109 = vmatpush1.msra.mxu0 0.0
    %110 = vmatprep.subr.mxu0 0.0
    %111 = vmatpush1.msra.mxu0 0.0
    %112 = vmatprep.subr.mxu0 0.0
    %113 = vmatpush1.msra.mxu0 0.0
    %114 = vmatprep.subr.mxu0 0.0
    %115 = vmatpush1.msra.mxu0 0.0
    %116 = vmatprep.subr.mxu0 0.0
    %117 = vmatpush1.msra.mxu0 0.0
    %118 = vmatprep.subr.mxu0 0.0
    %119 = vmatpush1.msra.mxu0 0.0
    %120 = vmatprep.subr.mxu0 0.0
    %121 = vmatpush1.msra.mxu0 0.0
    %122 = vmatprep.subr.mxu0 0.0
    %123 = vmatpush1.msra.mxu0 0.0
    %124 = vmatprep.subr.mxu0 0.0
    %125 = vmatpush1.msra.mxu0 0.0
    %126 = vmatprep.subr.mxu0 0.0
    %127 = vmatpush1.msra.mxu0 0.0
    %128 = vmatprep.subr.mxu0 0.0
    %129 = vmatpush1.msra.mxu0 0.0
    %130 = vmatprep.subr.mxu0 0.0
    %131 = vmatpush1.msra.mxu0 0.0
    %132 = vmatprep.mubr.f32.mxu0 0.0
    %133 = vmatmul.mubr.f32.gmra.mrb[0].mxu0 %v66
    %v134 = vpop.f32.mrb[0].mxu0
    %v135 = vadd.f32 0.0, %v134
    %v136 = vpop.f32.mrb[0].mxu0
    %137 = vdwg.mxu0
    %v138 = vadd.f32 %v63, %v135
    %vm139 = vcmask 125952
    %140 = vst.msk [vmem:[%s2] sm:$0xf] %vm139, %v138
    %v141 = vld [vmem:[%s3] sm:$0x7f]
    %142 = vmatprep.subr.mxu0 0.0
    %143 = vmatpush1.xpose.msra.mxu0 %v66
    %144 = vmatprep.subr.mxu0 0.0
    %145 = vmatpush1.xpose.msra.mxu0 0.0
    %146 = vmatprep.subr.mxu0 0.0
    %147 = vmatpush1.xpose.msra.mxu0 0.0
    %148 = vmatprep.subr.mxu0 0.0
    %149 = vmatpush1.xpose.msra.mxu0 0.0
    %150 = vmatprep.subr.mxu0 0.0
    %151 = vmatpush1.xpose.msra.mxu0 0.0
    %152 = vmatprep.subr.mxu0 0.0
    %153 = vmatpush1.xpose.msra.mxu0 0.0
    %154 = vmatprep.subr.mxu0 0.0
    %155 = vmatpush1.xpose.msra.mxu0 0.0
    %156 = vmatprep.subr.mxu0 0.0
    %157 = vmatpush1.xpose.msra.mxu0 0.0
    %158 = vmatprep.subr.mxu0 0.0
    %159 = vmatpush1.xpose.msra.mxu0 0.0
    %160 = vmatprep.subr.mxu0 0.0
    %161 = vmatpush1.xpose.msra.mxu0 0.0
    %162 = vmatprep.subr.mxu0 0.0
    %163 = vmatpush1.xpose.msra.mxu0 0.0
    %164 = vmatprep.subr.mxu0 0.0
    %165 = vmatpush1.xpose.msra.mxu0 0.0
    %166 = vmatprep.subr.mxu0 0.0
    %167 = vmatpush1.xpose.msra.mxu0 0.0
    %168 = vmatprep.subr.mxu0 0.0
    %169 = vmatpush1.xpose.msra.mxu0 0.0
    %170 = vmatprep.subr.mxu0 0.0
    %171 = vmatpush1.xpose.msra.mxu0 0.0
    %172 = vmatprep.subr.mxu0 0.0
    %173 = vmatpush1.xpose.msra.mxu0 0.0
    %174 = vmatprep.subr.mxu0 0.0
    %175 = vmatpush1.xpose.msra.mxu0 0.0
    %176 = vmatprep.subr.mxu0 0.0
    %177 = vmatpush1.xpose.msra.mxu0 0.0
    %178 = vmatprep.subr.mxu0 0.0
    %179 = vmatpush1.xpose.msra.mxu0 0.0
    %180 = vmatprep.subr.mxu0 0.0
    %181 = vmatpush1.xpose.msra.mxu0 0.0
    %182 = vmatprep.subr.mxu0 0.0
    %183 = vmatpush1.xpose.msra.mxu0 0.0
    %184 = vmatprep.subr.mxu0 0.0
    %185 = vmatpush1.xpose.msra.mxu0 0.0
    %186 = vmatprep.subr.mxu0 0.0
    %187 = vmatpush1.xpose.msra.mxu0 0.0
    %188 = vmatprep.subr.mxu0 0.0
    %189 = vmatpush1.xpose.msra.mxu0 0.0
    %190 = vmatprep.subr.mxu0 0.0
    %191 = vmatpush1.xpose.msra.mxu0 0.0
    %192 = vmatprep.subr.mxu0 0.0
    %193 = vmatpush1.xpose.msra.mxu0 0.0
    %194 = vmatprep.subr.mxu0 0.0
    %195 = vmatpush1.xpose.msra.mxu0 0.0
    %196 = vmatprep.subr.mxu0 0.0
    %197 = vmatpush1.xpose.msra.mxu0 0.0
    %198 = vmatprep.subr.mxu0 0.0
    %199 = vmatpush1.xpose.msra.mxu0 0.0
    %200 = vmatprep.subr.mxu0 0.0
    %201 = vmatpush1.xpose.msra.mxu0 0.0
    %202 = vmatprep.subr.mxu0 0.0
    %203 = vmatpush1.xpose.msra.mxu0 0.0
    %204 = vmatprep.subr.mxu0 0.0
    %205 = vmatpush1.xpose.msra.mxu0 0.0
    %206 = vmatprep.mubr.f32.mxu0 0.0
    %207 = vmatmul.mubr.f32.gmra.mrb[0].mxu0 %v66
    %v208 = vpop.f32.mrb[0].mxu0
    %v209 = vadd.f32 0.0, %v208
    %v210 = vpop.f32.mrb[0].mxu0
    %211 = vdwg.mxu0
    %v212 = vadd.f32 %v141, %v209
    %vm213 = vcmask 55296
    %214 = vst.msk [vmem:[%s3] sm:$0x7f] %vm213, %v212
    // Predicated region
    $region22: #{forward.1} parent=1 // pred_check
      _
    $region23: #{forward.1} parent=1 // pred_check_branch
      %216 = sbr.rel (0) target = $region25
    $region24: #{forward.1} parent=1 // pred_region
      _
    $region25: #{forward.1} parent=1 // pred_fallthru
      _
    // Predicated region
    $region26: #{forward.1} parent=1 // pred_check
      _
    $region27: #{forward.1} parent=1 // pred_check_branch
      %218 = sbr.rel (0) target = $region29
    $region28: #{forward.1} parent=1 // pred_region
      _
    $region29: #{forward.1} parent=1 // pred_fallthru
      _
    // Predicated region
    $region30: #{forward.1} parent=1 // pred_check
      _
    $region31: #{forward.1} parent=1 // pred_check_branch
      %220 = sbr.rel (0) target = $region33
    $region32: #{forward.1} parent=1 // pred_region
      _
    $region33: #{forward.1} parent=1 // pred_fallthru
      _
    // Predicated region
    $region34: #{forward.1} parent=1 // pred_check
      _
    $region35: #{forward.1} parent=1 // pred_check_branch
      %222 = sbr.rel (0) target = $region37
    $region36: #{forward.1} parent=1 // pred_region
      _
    $region37: #{forward.1} parent=1 // pred_fallthru
      _
    %223 = vsyncpa [#allocation3], 1
    %224 = vsyncpa [#allocation5], 1

</llo_original>
